<compile_context>
chip_gen: v7x
topology: tpu7x:2x2x1
jax: 0.10.0
libtpu: 0.0.40
codegen_flags: <defaults>
</compile_context>

<pallas_src>
import numpy as np
import jax
import jax.numpy as jnp
from jax import lax
from jax.experimental import pallas as pl
from jax.experimental.pallas import tpu as pltpu


# ----------------------------- Fused Pallas kernel -----------------------------

def make_fused_kernel(B, N, L, D, H, P, e_layers):
    """norm -> embedding -> stacked LSTM (recurrence over batch axis) ->
    projector -> de-norm, all in a single kernel invocation.  Output is
    emitted directly in the consumer's [B, P, N] layout."""

    def kernel(x_ref, w_emb_ref, b_emb_ref, *rest):
        # ---- unpack refs.  Layer 0 stays split (its input matmul is hoisted
        #      into phase 1); layers >= 1 use a fused [w_ih; w_hh] weight.
        w_ih0 = rest[0][...]                           # [D, 4H]
        w_hh0 = rest[1][...]                           # [H, 4H]
        b0 = rest[2][...]                              # [1, 4H]
        cats = []
        for l in range(1, e_layers):
            cats.append((rest[3 + 2 * (l - 1)][...],       # [2H, 4H]
                         rest[3 + 2 * (l - 1) + 1][...]))  # [1, 4H]
        n_lstm = 3 + 2 * (e_layers - 1)
        w_proj = rest[n_lstm][...]                     # [H, P]
        b_proj = rest[n_lstm + 1][...]                 # [1, P]
        out_ref = rest[n_lstm + 2]                     # [B, P, N]

        w_emb = w_emb_ref[...]                         # [L, D]
        b_emb = b_emb_ref[...]                         # [1, D]

        # ---- phase 1 (no serial dependence, batched across all B*N rows):
        #      in-kernel transpose to variate-major, instance norm over L,
        #      inverted embedding and the hoisted layer-0 input projection.
        rows = [x_ref[b].astype(jnp.float32).T for b in range(B)]   # B x [N, L]
        x_all = jnp.concatenate(rows, axis=0)                       # [B*N, L]
        mean = jnp.mean(x_all, axis=-1, keepdims=True)              # [B*N, 1]
        xc = x_all - mean
        var = jnp.mean(xc * xc, axis=-1, keepdims=True)             # unbiased=False
        std = jnp.sqrt(var + 1e-5)                                  # kept for de-norm
        xn = xc * lax.rsqrt(var + 1e-5)                             # EUP rsqrt

        emb = jnp.dot(xn, w_emb, preferred_element_type=jnp.float32) + b_emb   # [B*N, D]
        gx0 = jnp.dot(emb, w_ih0, preferred_element_type=jnp.float32) + b0     # [B*N, 4H]

        # biases for layers >= 1, broadcast once (JAX does not CSE broadcast_in_dim)
        b_bc = [jnp.broadcast_to(cats[l - 1][1], (N, 4 * H))
                for l in range(1, e_layers)]

        def cell(gates, c_prev):
            i_g = jax.nn.sigmoid(gates[:, 0 * H:1 * H])
            f_g = jax.nn.sigmoid(gates[:, 1 * H:2 * H])
            g_g = jnp.tanh(gates[:, 2 * H:3 * H])
            o_g = jax.nn.sigmoid(gates[:, 3 * H:4 * H])
            c_new = f_g * c_prev + i_g * g_g
            return o_g * jnp.tanh(c_new), c_new

        def cell_t0(gates):          # h_prev = c_prev = 0 -> f-gate path drops, bit-exact
            i_g = jax.nn.sigmoid(gates[:, 0 * H:1 * H])
            g_g = jnp.tanh(gates[:, 2 * H:3 * H])
            o_g = jax.nn.sigmoid(gates[:, 3 * H:4 * H])
            c_new = i_g * g_g
            return o_g * jnp.tanh(c_new), c_new

        # ---- phase 2: serial recurrence (sequence length == B).
        # Unrolled on purpose: B is tiny.  At larger B, switch to lax.fori_loop
        # with gx0 / h_top staged in VMEM scratch to avoid vreg spills.
        h = [None] * e_layers
        c = [None] * e_layers
        h_top = []

        # t == 0: all hidden/cell states are zero -> skip every h@W_hh matmul.
        h[0], c[0] = cell_t0(gx0[0:N])
        x_in = h[0]
        for l in range(1, e_layers):
            w_cat = cats[l - 1][0]
            gates = jnp.dot(x_in, w_cat[:H, :],
                            preferred_element_type=jnp.float32) + b_bc[l - 1]
            h[l], c[l] = cell_t0(gates)
            x_in = h[l]
        h_top.append(x_in)

        for t in range(1, B):
            gates0 = gx0[t * N:(t + 1) * N] + jnp.dot(
                h[0], w_hh0, preferred_element_type=jnp.float32)
            h[0], c[0] = cell(gates0, c[0])
            x_in = h[0]
            for l in range(1, e_layers):
                w_cat = cats[l - 1][0]
                xh = jnp.concatenate([x_in, h[l]], axis=-1)          # [N, 2H]
                gates = jnp.dot(xh, w_cat,
                                preferred_element_type=jnp.float32) + b_bc[l - 1]
                h[l], c[l] = cell(gates, c[l])
                x_in = h[l]
            h_top.append(x_in)

        # ---- phase 3 (batched): projector, de-norm, store in [B, P, N] layout.
        h_all = jnp.concatenate(h_top, axis=0)                        # [B*N, H]
        proj = jnp.dot(h_all, w_proj,
                       preferred_element_type=jnp.float32) + b_proj   # [B*N, P]
        out2d = proj * std + mean                                     # de-norm
        for b in range(B):
            out_ref[b] = out2d[b * N:(b + 1) * N, :].T                # [P, N]

    return kernel


# ----------------------------- Parameter packing & forward -----------------------------

def pack_kernel_params(params):
    """One-time weight prep (outside the forward path): layers >= 1 get a
    fused [D_in + H, 4H] input+recurrent weight."""
    lstm0 = params['lstm'][0]
    return dict(
        W_emb_t=params['W_emb_t'], b_emb=params['b_emb'],
        w_ih0=lstm0['w_ih_t'], w_hh0=lstm0['w_hh_t'], b0=lstm0['b'],
        cat=[(jnp.concatenate([lp['w_ih_t'], lp['w_hh_t']], axis=0), lp['b'])
             for lp in params['lstm'][1:]],
        W_proj_t=params['W_proj_t'], b_proj=params['b_proj'],
        e_layers=len(params['lstm']),
    )


def model_forward(packed, x_enc, x_mark_enc, cfg):
    # x_mark_enc is dead compute: the embedding/LSTM/projector never mix
    # variate rows and the PyTorch forward's [:, :, :N] slice drops the marks.
    del x_mark_enc
    B, L, N = x_enc.shape
    D = packed['W_emb_t'].shape[1]
    H = packed['W_proj_t'].shape[0]
    P = packed['W_proj_t'].shape[1]
    e_layers = packed['e_layers']

    inputs = [x_enc.astype(jnp.float32), packed['W_emb_t'], packed['b_emb'],
              packed['w_ih0'], packed['w_hh0'], packed['b0']]
    for w_cat, b_l in packed['cat']:
        inputs += [w_cat, b_l]
    inputs += [packed['W_proj_t'], packed['b_proj']]

    def full_spec(a):
        nd = a.ndim
        return pl.BlockSpec(a.shape, lambda i, _nd=nd: (0,) * _nd)

    out = pl.pallas_call(
        make_fused_kernel(B, N, L, D, H, P, e_layers),
        out_shape=jax.ShapeDtypeStruct((B, P, N), jnp.float32),
        grid=(1,),
        in_specs=[full_spec(a) for a in inputs],
        out_specs=pl.BlockSpec((B, P, N), lambda i: (0, 0, 0)),
        compiler_params=pltpu.CompilerParams(
            dimension_semantics=("arbitrary",)),
    )(*inputs)                                            # [B, P, N]

    # PyTorch forward slices [:, -pred_len:, :]; identity when the projector
    # width equals pred_len (true for this model) -> keep it conditional.
    if P != cfg['pred_len']:
        out = out[:, -cfg['pred_len']:, :]
    return out


# ----------------------------- Pure-JAX reference -----------------------------
# Keeps the time-mark variates (exactly like the PyTorch model) so the test
# also validates that pruning them in the kernel is output-identical.

def reference_forward(params, x_enc, x_mark_enc, cfg):
    x = x_enc.astype(jnp.float32)
    means = jnp.mean(x, axis=1, keepdims=True)
    xc = x - means
    std = jnp.sqrt(jnp.mean(xc * xc, axis=1, keepdims=True) + 1e-5)
    xn = xc / std
    x_inv = jnp.concatenate([jnp.transpose(xn, (0, 2, 1)),
                             jnp.transpose(x_mark_enc.astype(jnp.float32), (0, 2, 1))],
                            axis=1)                                   # [B, NV, L]
    h_seq = x_inv @ params['W_emb_t'] + params['b_emb'][0]
    H = cfg['d_ff']
    for lp in params['lstm']:
        NV = h_seq.shape[1]

        def step(carry, x_t, lp=lp):
            h, c = carry
            gates = x_t @ lp['w_ih_t'] + h @ lp['w_hh_t'] + lp['b'][0]
            i = jax.nn.sigmoid(gates[:, :H])
            f = jax.nn.sigmoid(gates[:, H:2 * H])
            g = jnp.tanh(gates[:, 2 * H:3 * H])
            o = jax.nn.sigmoid(gates[:, 3 * H:])
            c = f * c + i * g
            h = o * jnp.tanh(c)
            return (h, c), h

        (_, _), h_seq = lax.scan(step, (jnp.zeros((NV, H)), jnp.zeros((NV, H))), h_seq)
    proj = h_seq @ params['W_proj_t'] + params['b_proj'][0]           # [B, NV, P]
    N = x_enc.shape[-1]
    dec = jnp.transpose(proj, (0, 2, 1))[:, :, :N]
    dec = dec * std[:, 0, :][:, None, :] + means[:, 0, :][:, None, :]
    return dec[:, -cfg['pred_len']:, :]


# ----------------------------- Parameter init -----------------------------

def init_params(key, L, d_model, d_ff, e_layers, pred_len):
    keys = jax.random.split(key, 4 + e_layers)
    params = {}
    params['W_emb_t'] = 0.1 * jax.random.normal(keys[0], (L, d_model), jnp.float32)
    params['b_emb'] = 0.1 * jax.random.normal(keys[1], (1, d_model), jnp.float32)
    layers = []
    for l in range(e_layers):
        in_dim = d_model if l == 0 else d_ff
        k1, k2 = jax.random.split(keys[2 + l])
        layers.append(dict(
            w_ih_t=0.1 * jax.random.normal(k1, (in_dim, 4 * d_ff), jnp.float32),
            w_hh_t=0.1 * jax.random.normal(k2, (d_ff, 4 * d_ff), jnp.float32),
            b=0.05 * jnp.ones((1, 4 * d_ff), jnp.float32),   # b_ih + b_hh combined
        ))
    params['lstm'] = layers
    params['W_proj_t'] = 0.1 * jax.random.normal(keys[2 + e_layers], (d_ff, pred_len), jnp.float32)
    params['b_proj'] = 0.1 * jax.random.normal(keys[3 + e_layers], (1, pred_len), jnp.float32)
    return params


# ----------------------------- Main -----------------------------

if __name__ == "__main__":
    cfg = dict(seq_len=16, pred_len=8, d_model=32, d_ff=32, e_layers=2)
    B, L, N, M = 2, cfg['seq_len'], 6, 4

    key = jax.random.PRNGKey(0)
    kx, km, kp = jax.random.split(key, 3)
    x_enc = jax.random.normal(kx, (B, L, N), jnp.float32)
    x_mark_enc = jax.random.normal(km, (B, L, M), jnp.float32)
    params = init_params(kp, L, cfg['d_model'], cfg['d_ff'], cfg['e_layers'], cfg['pred_len'])

    packed = pack_kernel_params(params)   # one-time weight fusion (off the forward path)

    out = model_forward(packed, x_enc, x_mark_enc, cfg)
    out = jax.block_until_ready(out)

    ref = reference_forward(params, x_enc, x_mark_enc, cfg)
    assert out.shape == (B, cfg['pred_len'], N), out.shape
    np.testing.assert_allclose(np.asarray(out), np.asarray(ref), rtol=1e-4, atol=1e-4)
    print("KERNEL_OK")
</pallas_src>

<mosaic_0001>
module attributes {stable_mosaic.version = 11 : i64} {
  func.func @kernel(%arg0: i32, %arg1: memref<2x16x6xf32, #tpu.memory_space<vmem>>, %arg2: memref<16x32xf32, #tpu.memory_space<vmem>>, %arg3: memref<1x32xf32, #tpu.memory_space<vmem>>, %arg4: memref<32x128xf32, #tpu.memory_space<vmem>>, %arg5: memref<32x128xf32, #tpu.memory_space<vmem>>, %arg6: memref<1x128xf32, #tpu.memory_space<vmem>>, %arg7: memref<64x128xf32, #tpu.memory_space<vmem>>, %arg8: memref<1x128xf32, #tpu.memory_space<vmem>>, %arg9: memref<32x8xf32, #tpu.memory_space<vmem>>, %arg10: memref<1x8xf32, #tpu.memory_space<vmem>>, %arg11: memref<2x8x6xf32, #tpu.memory_space<vmem>>) attributes {dimension_semantics = [#tpu.dimension_semantics<arbitrary>], iteration_bounds = array<i64: 1>, scalar_prefetch = 0 : i64, scratch_operands = 0 : i64, tpu.core_type = #tpu.core_type<tc>, window_params = [{pipeline_mode = #tpu.pipeline_mode<synchronous>, transform_indices = @transform_0, window_bounds = array<i64: 2, 16, 6>}, {pipeline_mode = #tpu.pipeline_mode<synchronous>, transform_indices = @transform_1, window_bounds = array<i64: 16, 32>}, {pipeline_mode = #tpu.pipeline_mode<synchronous>, transform_indices = @transform_2, window_bounds = array<i64: 1, 32>}, {pipeline_mode = #tpu.pipeline_mode<synchronous>, transform_indices = @transform_3, window_bounds = array<i64: 32, 128>}, {pipeline_mode = #tpu.pipeline_mode<synchronous>, transform_indices = @transform_4, window_bounds = array<i64: 32, 128>}, {pipeline_mode = #tpu.pipeline_mode<synchronous>, transform_indices = @transform_5, window_bounds = array<i64: 1, 128>}, {pipeline_mode = #tpu.pipeline_mode<synchronous>, transform_indices = @transform_6, window_bounds = array<i64: 64, 128>}, {pipeline_mode = #tpu.pipeline_mode<synchronous>, transform_indices = @transform_7, window_bounds = array<i64: 1, 128>}, {pipeline_mode = #tpu.pipeline_mode<synchronous>, transform_indices = @transform_8, window_bounds = array<i64: 32, 8>}, {pipeline_mode = #tpu.pipeline_mode<synchronous>, transform_indices = @transform_9, window_bounds = array<i64: 1, 8>}, {pipeline_mode = #tpu.pipeline_mode<synchronous>, transform_indices = @transform_10, window_bounds = array<i64: 2, 8, 6>}]} {
    %c0 = arith.constant 0 : index
    %c0_0 = arith.constant 0 : index
    %0 = vector.load %arg4[%c0, %c0_0] : memref<32x128xf32, #tpu.memory_space<vmem>>, vector<32x128xf32>
    %c0_1 = arith.constant 0 : index
    %c0_2 = arith.constant 0 : index
    %1 = vector.load %arg5[%c0_1, %c0_2] : memref<32x128xf32, #tpu.memory_space<vmem>>, vector<32x128xf32>
    %c0_3 = arith.constant 0 : index
    %c0_4 = arith.constant 0 : index
    %2 = vector.load %arg6[%c0_3, %c0_4] : memref<1x128xf32, #tpu.memory_space<vmem>>, vector<1x128xf32>
    %c0_5 = arith.constant 0 : index
    %c0_6 = arith.constant 0 : index
    %3 = vector.load %arg7[%c0_5, %c0_6] : memref<64x128xf32, #tpu.memory_space<vmem>>, vector<64x128xf32>
    %c0_7 = arith.constant 0 : index
    %c0_8 = arith.constant 0 : index
    %4 = vector.load %arg8[%c0_7, %c0_8] : memref<1x128xf32, #tpu.memory_space<vmem>>, vector<1x128xf32>
    %c0_9 = arith.constant 0 : index
    %c0_10 = arith.constant 0 : index
    %5 = vector.load %arg9[%c0_9, %c0_10] : memref<32x8xf32, #tpu.memory_space<vmem>>, vector<32x8xf32>
    %c0_11 = arith.constant 0 : index
    %c0_12 = arith.constant 0 : index
    %6 = vector.load %arg10[%c0_11, %c0_12] : memref<1x8xf32, #tpu.memory_space<vmem>>, vector<1x8xf32>
    %c0_13 = arith.constant 0 : index
    %c0_14 = arith.constant 0 : index
    %7 = vector.load %arg2[%c0_13, %c0_14] : memref<16x32xf32, #tpu.memory_space<vmem>>, vector<16x32xf32>
    %c0_15 = arith.constant 0 : index
    %c0_16 = arith.constant 0 : index
    %8 = vector.load %arg3[%c0_15, %c0_16] : memref<1x32xf32, #tpu.memory_space<vmem>>, vector<1x32xf32>
    %c0_17 = arith.constant 0 : index
    %c0_18 = arith.constant 0 : index
    %c0_19 = arith.constant 0 : index
    %9 = vector.load %arg1[%c0_17, %c0_18, %c0_19] : memref<2x16x6xf32, #tpu.memory_space<vmem>>, vector<1x16x6xf32>
    %10 = vector.shape_cast %9 : vector<1x16x6xf32> to vector<16x6xf32>
    %11 = tpu.transpose %10, [1, 0] : vector<16x6xf32> -> vector<6x16xf32>
    %c1 = arith.constant 1 : index
    %c0_20 = arith.constant 0 : index
    %c0_21 = arith.constant 0 : index
    %12 = vector.load %arg1[%c1, %c0_20, %c0_21] : memref<2x16x6xf32, #tpu.memory_space<vmem>>, vector<1x16x6xf32>
    %13 = vector.shape_cast %12 : vector<1x16x6xf32> to vector<16x6xf32>
    %14 = tpu.transpose %13, [1, 0] : vector<16x6xf32> -> vector<6x16xf32>
    %15 = tpu.concatenate %11, %14 in 0 : vector<6x16xf32>, vector<6x16xf32> -> vector<12x16xf32>
    %cst = arith.constant dense<0.000000e+00> : vector<12xf32>
    %16 = vector.multi_reduction <add>, %15, %cst [1] : vector<12x16xf32> to vector<12xf32>
    %17 = vector.shape_cast %16 : vector<12xf32> to vector<12x1xf32>
    %cst_22 = arith.constant 1.600000e+01 : f32
    %18 = vector.broadcast %cst_22 : f32 to vector<12x1xf32>
    %19 = arith.divf %17, %18 : vector<12x1xf32>
    %20 = vector.broadcast %19 : vector<12x1xf32> to vector<12x16xf32>
    %21 = arith.subf %15, %20 : vector<12x16xf32>
    %22 = arith.mulf %21, %21 : vector<12x16xf32>
    %cst_23 = arith.constant dense<0.000000e+00> : vector<12xf32>
    %23 = vector.multi_reduction <add>, %22, %cst_23 [1] : vector<12x16xf32> to vector<12xf32>
    %24 = vector.shape_cast %23 : vector<12xf32> to vector<12x1xf32>
    %cst_24 = arith.constant 1.600000e+01 : f32
    %25 = vector.broadcast %cst_24 : f32 to vector<12x1xf32>
    %26 = arith.divf %24, %25 : vector<12x1xf32>
    %cst_25 = arith.constant 9.99999974E-6 : f32
    %27 = vector.broadcast %cst_25 : f32 to vector<12x1xf32>
    %28 = arith.addf %26, %27 : vector<12x1xf32>
    %29 = math.sqrt %28 : vector<12x1xf32>
    %cst_26 = arith.constant 9.99999974E-6 : f32
    %30 = vector.broadcast %cst_26 : f32 to vector<12x1xf32>
    %31 = arith.addf %26, %30 : vector<12x1xf32>
    %32 = math.rsqrt %31 : vector<12x1xf32>
    %33 = vector.broadcast %32 : vector<12x1xf32> to vector<12x16xf32>
    %34 = arith.mulf %21, %33 : vector<12x16xf32>
    %cst_27 = arith.constant dense<0.000000e+00> : vector<12x32xf32>
    %35 = tpu.matmul %34, %7, %cst_27 {dimension_numbers = #tpu.dot_dimension_numbers<[1], [0], [0], [1], [0, 0, 1, 1], [], []>} : vector<12x16xf32>, vector<16x32xf32>, vector<12x32xf32> -> vector<12x32xf32>
    %36 = vector.broadcast %8 : vector<1x32xf32> to vector<12x32xf32>
    %37 = arith.addf %35, %36 : vector<12x32xf32>
    %cst_28 = arith.constant dense<0.000000e+00> : vector<12x128xf32>
    %38 = tpu.matmul %37, %0, %cst_28 {dimension_numbers = #tpu.dot_dimension_numbers<[1], [0], [0], [1], [0, 0, 1, 1], [], []>} : vector<12x32xf32>, vector<32x128xf32>, vector<12x128xf32> -> vector<12x128xf32>
    %39 = vector.broadcast %2 : vector<1x128xf32> to vector<12x128xf32>
    %40 = arith.addf %38, %39 : vector<12x128xf32>
    %41 = vector.shape_cast %4 : vector<1x128xf32> to vector<1x128xf32>
    %42 = vector.broadcast %41 : vector<1x128xf32> to vector<6x128xf32>
    %43 = vector.extract_strided_slice %40 {offsets = [0, 0], sizes = [6, 128], strides = [1, 1]} : vector<12x128xf32> to vector<6x128xf32>
    %44 = vector.extract_strided_slice %43 {offsets = [0, 0], sizes = [6, 32], strides = [1, 1]} : vector<6x128xf32> to vector<6x32xf32>
    %45 = arith.negf %44 : vector<6x32xf32>
    %46 = math.exp %45 : vector<6x32xf32>
    %cst_29 = arith.constant 1.000000e+00 : f32
    %47 = vector.broadcast %cst_29 : f32 to vector<6x32xf32>
    %48 = arith.addf %47, %46 : vector<6x32xf32>
    %49 = arith.divf %47, %48 : vector<6x32xf32>
    %50 = vector.extract_strided_slice %43 {offsets = [0, 64], sizes = [6, 32], strides = [1, 1]} : vector<6x128xf32> to vector<6x32xf32>
    %51 = math.tanh %50 : vector<6x32xf32>
    %52 = vector.extract_strided_slice %43 {offsets = [0, 96], sizes = [6, 32], strides = [1, 1]} : vector<6x128xf32> to vector<6x32xf32>
    %53 = arith.negf %52 : vector<6x32xf32>
    %54 = math.exp %53 : vector<6x32xf32>
    %cst_30 = arith.constant 1.000000e+00 : f32
    %55 = vector.broadcast %cst_30 : f32 to vector<6x32xf32>
    %56 = arith.addf %55, %54 : vector<6x32xf32>
    %57 = arith.divf %55, %56 : vector<6x32xf32>
    %58 = arith.mulf %49, %51 : vector<6x32xf32>
    %59 = math.tanh %58 : vector<6x32xf32>
    %60 = arith.mulf %57, %59 : vector<6x32xf32>
    %61 = vector.extract_strided_slice %3 {offsets = [0, 0], sizes = [32, 128], strides = [1, 1]} : vector<64x128xf32> to vector<32x128xf32>
    %cst_31 = arith.constant dense<0.000000e+00> : vector<6x128xf32>
    %62 = tpu.matmul %60, %61, %cst_31 {dimension_numbers = #tpu.dot_dimension_numbers<[1], [0], [0], [1], [0, 0, 1, 1], [], []>} : vector<6x32xf32>, vector<32x128xf32>, vector<6x128xf32> -> vector<6x128xf32>
    %63 = arith.addf %62, %42 : vector<6x128xf32>
    %64 = vector.extract_strided_slice %63 {offsets = [0, 0], sizes = [6, 32], strides = [1, 1]} : vector<6x128xf32> to vector<6x32xf32>
    %65 = arith.negf %64 : vector<6x32xf32>
    %66 = math.exp %65 : vector<6x32xf32>
    %cst_32 = arith.constant 1.000000e+00 : f32
    %67 = vector.broadcast %cst_32 : f32 to vector<6x32xf32>
    %68 = arith.addf %67, %66 : vector<6x32xf32>
    %69 = arith.divf %67, %68 : vector<6x32xf32>
    %70 = vector.extract_strided_slice %63 {offsets = [0, 64], sizes = [6, 32], strides = [1, 1]} : vector<6x128xf32> to vector<6x32xf32>
    %71 = math.tanh %70 : vector<6x32xf32>
    %72 = vector.extract_strided_slice %63 {offsets = [0, 96], sizes = [6, 32], strides = [1, 1]} : vector<6x128xf32> to vector<6x32xf32>
    %73 = arith.negf %72 : vector<6x32xf32>
    %74 = math.exp %73 : vector<6x32xf32>
    %cst_33 = arith.constant 1.000000e+00 : f32
    %75 = vector.broadcast %cst_33 : f32 to vector<6x32xf32>
    %76 = arith.addf %75, %74 : vector<6x32xf32>
    %77 = arith.divf %75, %76 : vector<6x32xf32>
    %78 = arith.mulf %69, %71 : vector<6x32xf32>
    %79 = math.tanh %78 : vector<6x32xf32>
    %80 = arith.mulf %77, %79 : vector<6x32xf32>
    %81 = vector.extract_strided_slice %40 {offsets = [6, 0], sizes = [6, 128], strides = [1, 1]} : vector<12x128xf32> to vector<6x128xf32>
    %cst_34 = arith.constant dense<0.000000e+00> : vector<6x128xf32>
    %82 = tpu.matmul %60, %1, %cst_34 {dimension_numbers = #tpu.dot_dimension_numbers<[1], [0], [0], [1], [0, 0, 1, 1], [], []>} : vector<6x32xf32>, vector<32x128xf32>, vector<6x128xf32> -> vector<6x128xf32>
    %83 = arith.addf %81, %82 : vector<6x128xf32>
    %84 = vector.extract_strided_slice %83 {offsets = [0, 0], sizes = [6, 32], strides = [1, 1]} : vector<6x128xf32> to vector<6x32xf32>
    %85 = arith.negf %84 : vector<6x32xf32>
    %86 = math.exp %85 : vector<6x32xf32>
    %cst_35 = arith.constant 1.000000e+00 : f32
    %87 = vector.broadcast %cst_35 : f32 to vector<6x32xf32>
    %88 = arith.addf %87, %86 : vector<6x32xf32>
    %89 = arith.divf %87, %88 : vector<6x32xf32>
    %90 = vector.extract_strided_slice %83 {offsets = [0, 32], sizes = [6, 32], strides = [1, 1]} : vector<6x128xf32> to vector<6x32xf32>
    %91 = arith.negf %90 : vector<6x32xf32>
    %92 = math.exp %91 : vector<6x32xf32>
    %cst_36 = arith.constant 1.000000e+00 : f32
    %93 = vector.broadcast %cst_36 : f32 to vector<6x32xf32>
    %94 = arith.addf %93, %92 : vector<6x32xf32>
    %95 = arith.divf %93, %94 : vector<6x32xf32>
    %96 = vector.extract_strided_slice %83 {offsets = [0, 64], sizes = [6, 32], strides = [1, 1]} : vector<6x128xf32> to vector<6x32xf32>
    %97 = math.tanh %96 : vector<6x32xf32>
    %98 = vector.extract_strided_slice %83 {offsets = [0, 96], sizes = [6, 32], strides = [1, 1]} : vector<6x128xf32> to vector<6x32xf32>
    %99 = arith.negf %98 : vector<6x32xf32>
    %100 = math.exp %99 : vector<6x32xf32>
    %cst_37 = arith.constant 1.000000e+00 : f32
    %101 = vector.broadcast %cst_37 : f32 to vector<6x32xf32>
    %102 = arith.addf %101, %100 : vector<6x32xf32>
    %103 = arith.divf %101, %102 : vector<6x32xf32>
    %104 = arith.mulf %95, %58 : vector<6x32xf32>
    %105 = arith.mulf %89, %97 : vector<6x32xf32>
    %106 = arith.addf %104, %105 : vector<6x32xf32>
    %107 = math.tanh %106 : vector<6x32xf32>
    %108 = arith.mulf %103, %107 : vector<6x32xf32>
    %109 = tpu.concatenate %108, %80 in 1 : vector<6x32xf32>, vector<6x32xf32> -> vector<6x64xf32>
    %cst_38 = arith.constant dense<0.000000e+00> : vector<6x128xf32>
    %110 = tpu.matmul %109, %3, %cst_38 {dimension_numbers = #tpu.dot_dimension_numbers<[1], [0], [0], [1], [0, 0, 1, 1], [], []>} : vector<6x64xf32>, vector<64x128xf32>, vector<6x128xf32> -> vector<6x128xf32>
    %111 = arith.addf %110, %42 : vector<6x128xf32>
    %112 = vector.extract_strided_slice %111 {offsets = [0, 0], sizes = [6, 32], strides = [1, 1]} : vector<6x128xf32> to vector<6x32xf32>
    %113 = arith.negf %112 : vector<6x32xf32>
    %114 = math.exp %113 : vector<6x32xf32>
    %cst_39 = arith.constant 1.000000e+00 : f32
    %115 = vector.broadcast %cst_39 : f32 to vector<6x32xf32>
    %116 = arith.addf %115, %114 : vector<6x32xf32>
    %117 = arith.divf %115, %116 : vector<6x32xf32>
    %118 = vector.extract_strided_slice %111 {offsets = [0, 32], sizes = [6, 32], strides = [1, 1]} : vector<6x128xf32> to vector<6x32xf32>
    %119 = arith.negf %118 : vector<6x32xf32>
    %120 = math.exp %119 : vector<6x32xf32>
    %cst_40 = arith.constant 1.000000e+00 : f32
    %121 = vector.broadcast %cst_40 : f32 to vector<6x32xf32>
    %122 = arith.addf %121, %120 : vector<6x32xf32>
    %123 = arith.divf %121, %122 : vector<6x32xf32>
    %124 = vector.extract_strided_slice %111 {offsets = [0, 64], sizes = [6, 32], strides = [1, 1]} : vector<6x128xf32> to vector<6x32xf32>
    %125 = math.tanh %124 : vector<6x32xf32>
    %126 = vector.extract_strided_slice %111 {offsets = [0, 96], sizes = [6, 32], strides = [1, 1]} : vector<6x128xf32> to vector<6x32xf32>
    %127 = arith.negf %126 : vector<6x32xf32>
    %128 = math.exp %127 : vector<6x32xf32>
    %cst_41 = arith.constant 1.000000e+00 : f32
    %129 = vector.broadcast %cst_41 : f32 to vector<6x32xf32>
    %130 = arith.addf %129, %128 : vector<6x32xf32>
    %131 = arith.divf %129, %130 : vector<6x32xf32>
    %132 = arith.mulf %123, %78 : vector<6x32xf32>
    %133 = arith.mulf %117, %125 : vector<6x32xf32>
    %134 = arith.addf %132, %133 : vector<6x32xf32>
    %135 = math.tanh %134 : vector<6x32xf32>
    %136 = arith.mulf %131, %135 : vector<6x32xf32>
    %137 = tpu.concatenate %80, %136 in 0 : vector<6x32xf32>, vector<6x32xf32> -> vector<12x32xf32>
    %cst_42 = arith.constant dense<0.000000e+00> : vector<12x8xf32>
    %138 = tpu.matmul %137, %5, %cst_42 {dimension_numbers = #tpu.dot_dimension_numbers<[1], [0], [0], [1], [0, 0, 1, 1], [], []>} : vector<12x32xf32>, vector<32x8xf32>, vector<12x8xf32> -> vector<12x8xf32>
    %139 = vector.broadcast %6 : vector<1x8xf32> to vector<12x8xf32>
    %140 = arith.addf %138, %139 : vector<12x8xf32>
    %141 = vector.broadcast %29 : vector<12x1xf32> to vector<12x8xf32>
    %142 = arith.mulf %140, %141 : vector<12x8xf32>
    %143 = vector.broadcast %19 : vector<12x1xf32> to vector<12x8xf32>
    %144 = arith.addf %142, %143 : vector<12x8xf32>
    %145 = vector.extract_strided_slice %144 {offsets = [0, 0], sizes = [6, 8], strides = [1, 1]} : vector<12x8xf32> to vector<6x8xf32>
    %146 = tpu.transpose %145, [1, 0] : vector<6x8xf32> -> vector<8x6xf32>
    %c0_43 = arith.constant 0 : index
    %c0_44 = arith.constant 0 : index
    %c0_45 = arith.constant 0 : index
    %147 = vector.load %arg11[%c0_43, %c0_44, %c0_45] : memref<2x8x6xf32, #tpu.memory_space<vmem>>, vector<1x8x6xf32>
    %148 = vector.shape_cast %147 : vector<1x8x6xf32> to vector<8x6xf32>
    %149 = vector.shape_cast %146 : vector<8x6xf32> to vector<1x8x6xf32>
    tpu.vector_store %arg11[%c0_43, %c0_44, %c0_45], %149 {strides = array<i32>} : memref<2x8x6xf32, #tpu.memory_space<vmem>>, vector<1x8x6xf32>,
    %150 = vector.extract_strided_slice %144 {offsets = [6, 0], sizes = [6, 8], strides = [1, 1]} : vector<12x8xf32> to vector<6x8xf32>
    %151 = tpu.transpose %150, [1, 0] : vector<6x8xf32> -> vector<8x6xf32>
    %c1_46 = arith.constant 1 : index
    %c0_47 = arith.constant 0 : index
    %c0_48 = arith.constant 0 : index
    %152 = vector.load %arg11[%c1_46, %c0_47, %c0_48] : memref<2x8x6xf32, #tpu.memory_space<vmem>>, vector<1x8x6xf32>
    %153 = vector.shape_cast %152 : vector<1x8x6xf32> to vector<8x6xf32>
    %154 = vector.shape_cast %151 : vector<8x6xf32> to vector<1x8x6xf32>
    tpu.vector_store %arg11[%c1_46, %c0_47, %c0_48], %154 {strides = array<i32>} : memref<2x8x6xf32, #tpu.memory_space<vmem>>, vector<1x8x6xf32>,
    return
  }
  func.func @transform_0(%arg0: i32) -> (i32, i32, i32) {
    %c0_i32 = arith.constant 0 : i32
    %c0_i32_0 = arith.constant 0 : i32
    %c0_i32_1 = arith.constant 0 : i32
    %c0_i32_2 = arith.constant 0 : i32
    return %c0_i32, %c0_i32_0, %c0_i32_1 : i32, i32, i32
  }
  func.func @transform_1(%arg0: i32) -> (i32, i32) {
    %c0_i32 = arith.constant 0 : i32
    %c0_i32_0 = arith.constant 0 : i32
    %c0_i32_1 = arith.constant 0 : i32
    return %c0_i32, %c0_i32_0 : i32, i32
  }
  func.func @transform_2(%arg0: i32) -> (i32, i32) {
    %c0_i32 = arith.constant 0 : i32
    %c0_i32_0 = arith.constant 0 : i32
    %c0_i32_1 = arith.constant 0 : i32
    return %c0_i32, %c0_i32_0 : i32, i32
  }
  func.func @transform_3(%arg0: i32) -> (i32, i32) {
    %c0_i32 = arith.constant 0 : i32
    %c0_i32_0 = arith.constant 0 : i32
    %c0_i32_1 = arith.constant 0 : i32
    return %c0_i32, %c0_i32_0 : i32, i32
  }
  func.func @transform_4(%arg0: i32) -> (i32, i32) {
    %c0_i32 = arith.constant 0 : i32
    %c0_i32_0 = arith.constant 0 : i32
    %c0_i32_1 = arith.constant 0 : i32
    return %c0_i32, %c0_i32_0 : i32, i32
  }
  func.func @transform_5(%arg0: i32) -> (i32, i32) {
    %c0_i32 = arith.constant 0 : i32
    %c0_i32_0 = arith.constant 0 : i32
    %c0_i32_1 = arith.constant 0 : i32
    return %c0_i32, %c0_i32_0 : i32, i32
  }
  func.func @transform_6(%arg0: i32) -> (i32, i32) {
    %c0_i32 = arith.constant 0 : i32
    %c0_i32_0 = arith.constant 0 : i32
    %c0_i32_1 = arith.constant 0 : i32
    return %c0_i32, %c0_i32_0 : i32, i32
  }
  func.func @transform_7(%arg0: i32) -> (i32, i32) {
    %c0_i32 = arith.constant 0 : i32
    %c0_i32_0 = arith.constant 0 : i32
    %c0_i32_1 = arith.constant 0 : i32
    return %c0_i32, %c0_i32_0 : i32, i32
  }
  func.func @transform_8(%arg0: i32) -> (i32, i32) {
    %c0_i32 = arith.constant 0 : i32
    %c0_i32_0 = arith.constant 0 : i32
    %c0_i32_1 = arith.constant 0 : i32
    return %c0_i32, %c0_i32_0 : i32, i32
  }
  func.func @transform_9(%arg0: i32) -> (i32, i32) {
    %c0_i32 = arith.constant 0 : i32
    %c0_i32_0 = arith.constant 0 : i32
    %c0_i32_1 = arith.constant 0 : i32
    return %c0_i32, %c0_i32_0 : i32, i32
  }
  func.func @transform_10(%arg0: i32) -> (i32, i32, i32) {
    %c0_i32 = arith.constant 0 : i32
    %c0_i32_0 = arith.constant 0 : i32
    %c0_i32_1 = arith.constant 0 : i32
    %c0_i32_2 = arith.constant 0 : i32
    return %c0_i32, %c0_i32_0, %c0_i32_1 : i32, i32, i32
  }
}

</mosaic_0001>

<llo_original>
// kernel: tpu_custom_call.1
$region0: #{tpu_custom_call.1}
  #allocation0 [shape = 'u32[]', space=smem, size = 0x4, offset = 0x4, fixed_abs, tag = 'smem constant byte address 0x4 - core index']
  #allocation1 [shape = 'u32[144,128]{1,0:T(1,128)}', space=vmem, size = 0x12000, scoped, tag = 'internal scratch']
  %s0 = inlined_call_operand.vmem [shape: f32[2,16,6], index: 0, kind: input, shape index: {}]
  %s1 = inlined_call_operand.hbm [shape: f32[16,32], index: 1, kind: input, shape index: {}]
  %s2 = inlined_call_operand.vmem [shape: f32[1,32], index: 2, kind: input, shape index: {}]
  %s3 = inlined_call_operand.vmem [shape: f32[32,128], index: 3, kind: input, shape index: {}]
  %s4 = inlined_call_operand.hbm [shape: f32[32,128], index: 4, kind: input, shape index: {}]
  %s5 = inlined_call_operand.vmem [shape: f32[1,128], index: 5, kind: input, shape index: {}]
  %s6 = inlined_call_operand.vmem [shape: f32[64,128], index: 6, kind: input, shape index: {}]
  %s7 = inlined_call_operand.vmem [shape: f32[1,128], index: 7, kind: input, shape index: {}]
  %s8 = inlined_call_operand.vmem [shape: f32[32,8], index: 8, kind: input, shape index: {}]
  %s9 = inlined_call_operand.vmem [shape: f32[1,8], index: 9, kind: input, shape index: {}]
  %s10 = inlined_call_operand.vmem [shape: f32[2,8,6], index: 10, kind: output, shape index: {}]
  %s11 = sld [smem:[#allocation0]]
  $region58: #{tpu_custom_call.1} parent=0
    _
  %s13 = ssub.s32 1, %s11
  %s14 = scalar_select 0, %s13, %s11
  $region1: #{tpu_custom_call.1} parent=0
    #allocation2 [shape = 'u8[8192]{0}', space=vmem, size = 0x2000, scoped, tag = 'input window, operand 1, single buffered']
    #allocation3 [shape = 's32[1]{0}', space=sflag, size = 0x4, scoped, tag = 'scoped memory for tpu_custom_call.1']
    #allocation4 [shape = 'u8[16384]{0}', space=vmem, size = 0x4000, scoped, tag = 'input window, operand 4, single buffered']
    #allocation5 [shape = 's32[1]{0}', space=sflag, size = 0x4, scoped, tag = 'scoped memory for tpu_custom_call.1']
    %15 = vsyncpa [#allocation3], 0
    %16 = vsyncpa [#allocation5], 0
    // Predicated region
    $region2: #{tpu_custom_call.1} parent=1 // pred_check
      _
    $region3: #{tpu_custom_call.1} parent=1 // pred_check_branch
      %18 = sbr.rel (0) target = $region5
    $region4: #{tpu_custom_call.1} parent=1 // pred_region
      _
    $region5: #{tpu_custom_call.1} parent=1 // pred_fallthru
      _
    // Predicated region
    $region6: #{tpu_custom_call.1} parent=1 // pred_check
      _
    $region7: #{tpu_custom_call.1} parent=1 // pred_check_branch
      %20 = sbr.rel (0) target = $region9
    $region8: #{tpu_custom_call.1} parent=1 // pred_region
      %s22 = ssub.s32 256, 256
      %23 = vsyncadd [#allocation3], %s22
      %s24 = sshll.u32 [#allocation2], 4
      %s25 = int_to_ptr.vmem [resolvable:$true] %s24
      %30 = dma.hbm_to_vmem [thread:$0]  %s1, 256, %s25, [#allocation3], 128, 128, 8
    $region9: #{tpu_custom_call.1} parent=1 // pred_fallthru
      _
    // Predicated region
    $region10: #{tpu_custom_call.1} parent=1 // pred_check
      _
    $region11: #{tpu_custom_call.1} parent=1 // pred_check_branch
      %32 = sbr.rel (0) target = $region13
    $region12: #{tpu_custom_call.1} parent=1 // pred_region
      _
    $region13: #{tpu_custom_call.1} parent=1 // pred_fallthru
      _
    // Predicated region
    $region14: #{tpu_custom_call.1} parent=1 // pred_check
      _
    $region15: #{tpu_custom_call.1} parent=1 // pred_check_branch
      %34 = sbr.rel (0) target = $region17
    $region16: #{tpu_custom_call.1} parent=1 // pred_region
      _
    $region17: #{tpu_custom_call.1} parent=1 // pred_fallthru
      _
    // Predicated region
    $region18: #{tpu_custom_call.1} parent=1 // pred_check
      _
    $region19: #{tpu_custom_call.1} parent=1 // pred_check_branch
      %36 = sbr.rel (0) target = $region21
    $region20: #{tpu_custom_call.1} parent=1 // pred_region
      %s38 = ssub.s32 512, 512
      %39 = vsyncadd [#allocation5], %s38
      %s40 = sshll.u32 [#allocation4], 4
      %s41 = int_to_ptr.vmem [resolvable:$true] %s40
      %46 = dma.hbm_to_vmem [thread:$0]  %s4, 512, %s41, [#allocation5], 128, 128, 8
    $region21: #{tpu_custom_call.1} parent=1 // pred_fallthru
      _
    // Predicated region
    $region22: #{tpu_custom_call.1} parent=1 // pred_check
      _
    $region23: #{tpu_custom_call.1} parent=1 // pred_check_branch
      %48 = sbr.rel (0) target = $region25
    $region24: #{tpu_custom_call.1} parent=1 // pred_region
      _
    $region25: #{tpu_custom_call.1} parent=1 // pred_fallthru
      _
    // Predicated region
    $region26: #{tpu_custom_call.1} parent=1 // pred_check
      _
    $region27: #{tpu_custom_call.1} parent=1 // pred_check_branch
      %50 = sbr.rel (0) target = $region29
    $region28: #{tpu_custom_call.1} parent=1 // pred_region
      _
    $region29: #{tpu_custom_call.1} parent=1 // pred_fallthru
      _
    // Predicated region
    $region30: #{tpu_custom_call.1} parent=1 // pred_check
      _
    $region31: #{tpu_custom_call.1} parent=1 // pred_check_branch
      %52 = sbr.rel (0) target = $region33
    $region32: #{tpu_custom_call.1} parent=1 // pred_region
      _
    $region33: #{tpu_custom_call.1} parent=1 // pred_fallthru
      _
    // Predicated region
    $region34: #{tpu_custom_call.1} parent=1 // pred_check
      _
    $region35: #{tpu_custom_call.1} parent=1 // pred_check_branch
      %54 = sbr.rel (0) target = $region37
    $region36: #{tpu_custom_call.1} parent=1 // pred_region
      _
    $region37: #{tpu_custom_call.1} parent=1 // pred_fallthru
      _
    // Predicated region
    $region38: #{tpu_custom_call.1} parent=1 // pred_check
      _
    $region39: #{tpu_custom_call.1} parent=1 // pred_check_branch
      %56 = sbr.rel (0) target = $region41
    $region40: #{tpu_custom_call.1} parent=1 // pred_region
      _
    $region41: #{tpu_custom_call.1} parent=1 // pred_fallthru
      _
    // Predicated region
    $region42: #{tpu_custom_call.1} parent=1 // pred_check
      _
    $region43: #{tpu_custom_call.1} parent=1 // pred_check_branch
      %58 = sbr.rel (0) target = $region45
    $region44: #{tpu_custom_call.1} parent=1 // pred_region
      %59 = dma.done [#allocation3], 256
    $region45: #{tpu_custom_call.1} parent=1 // pred_fallthru
      _
    // Predicated region
    $region46: #{tpu_custom_call.1} parent=1 // pred_check
      _
    $region47: #{tpu_custom_call.1} parent=1 // pred_check_branch
      %61 = sbr.rel (0) target = $region49
    $region48: #{tpu_custom_call.1} parent=1 // pred_region
      %62 = dma.done [#allocation5], 512
    $region49: #{tpu_custom_call.1} parent=1 // pred_fallthru
      _
    %v63 = vld [vmem:[%s3] sm:$0xff]
    %v64 = vld [vmem:[%s3 + $0x8] sm:$0xff]
    %v65 = vld [vmem:[%s3 + $0x10] sm:$0xff]
    %v66 = vld [vmem:[%s3 + $0x18] sm:$0xff]
    %v67 = vld [vmem:[#allocation4] sm:$0xff]
    %v68 = vld [vmem:[#allocation4 + $0x8] sm:$0xff]
    %v69 = vld [vmem:[#allocation4 + $0x10] sm:$0xff]
    %v70 = vld [vmem:[#allocation4 + $0x18] sm:$0xff]
    %v71 = vld [vmem:[%s5] sm:$0x1]
    %v72 = vld [vmem:[%s6] sm:$0xff]
    %v73 = vld [vmem:[%s6 + $0x8] sm:$0xff]
    %v74 = vld [vmem:[%s6 + $0x10] sm:$0xff]
    %v75 = vld [vmem:[%s6 + $0x18] sm:$0xff]
    %v76 = vld [vmem:[%s6 + $0x20] sm:$0xff]
    %v77 = vld [vmem:[%s6 + $0x28] sm:$0xff]
    %v78 = vld [vmem:[%s6 + $0x30] sm:$0xff]
    %v79 = vld [vmem:[%s6 + $0x38] sm:$0xff]
    %v80 = vld [vmem:[%s7] sm:$0x1]
    %v81 = vld [vmem:[%s8] sm:$0xff]
    %v82 = vld [vmem:[%s8 + $0x8] sm:$0xff]
    %v83 = vld [vmem:[%s8 + $0x10] sm:$0xff]
    %v84 = vld [vmem:[%s8 + $0x18] sm:$0xff]
    %v85 = vld [vmem:[%s9] sm:$0x1]
    %v86 = vld [vmem:[#allocation2] sm:$0xff]
    %v87 = vld [vmem:[#allocation2 + $0x8] sm:$0xff]
    %v88 = vld [vmem:[%s2] sm:$0x1]
    %v89 = vld [vmem:[%s0] sm:$0xff]
    %v90 = vld [vmem:[%s0 + $0x8] sm:$0xff]
    %91 = vxpose.xlu0.b32.start [1/16] %v89, 128
    %92 = vxpose.xlu0.b32.cont [2/16] %v90, 128
    %93 = vxpose.xlu0.b32.cont [3/16] 0.0, 128
    %94 = vxpose.xlu0.b32.cont [4/16] 0.0, 128
    %95 = vxpose.xlu0.b32.cont [5/16] 0.0, 128
    %96 = vxpose.xlu0.b32.cont [6/16] 0.0, 128
    %97 = vxpose.xlu0.b32.cont [7/16] 0.0, 128
    %98 = vxpose.xlu0.b32.cont [8/16] 0.0, 128
    %99 = vxpose.xlu0.b32.cont [9/16] 0.0, 128
    %100 = vxpose.xlu0.b32.cont [10/16] 0.0, 128
    %101 = vxpose.xlu0.b32.cont [11/16] 0.0, 128
    %102 = vxpose.xlu0.b32.cont [12/16] 0.0, 128
    %103 = vxpose.xlu0.b32.cont [13/16] 0.0, 128
    %104 = vxpose.xlu0.b32.cont [14/16] 0.0, 128
    %105 = vxpose.xlu0.b32.cont [15/16] 0.0, 128
    %106 = vxpose.xlu0.b32.end [16/16] 0.0, 128
    %v107 = vpop.trf.xlu0
    %v108 = vpop.trf.xlu0
    %v109 = vpop.trf.xlu0
    %v110 = vpop.trf.xlu0
    %v111 = vpop.trf.xlu0
    %v112 = vpop.trf.xlu0
    %v113 = vpop.trf.xlu0
    %v114 = vpop.trf.xlu0
    %v115 = vpop.trf.xlu0
    %v116 = vpop.trf.xlu0
    %v117 = vpop.trf.xlu0
    %v118 = vpop.trf.xlu0
    %v119 = vpop.trf.xlu0
    %v120 = vpop.trf.xlu0
    %v121 = vpop.trf.xlu0
    %v122 = vpop.trf.xlu0
    %s123 = scalar_lea.vmem %s0, 16
    %v124 = vld [vmem:[%s123] sm:$0xff]
    %v125 = vld [vmem:[%s123 + $0x8] sm:$0xff]
    %126 = vxpose.xlu0.b32.start [1/16] %v124, 128
    %127 = vxpose.xlu0.b32.cont [2/16] %v125, 128
    %128 = vxpose.xlu0.b32.cont [3/16] 0.0, 128
    %129 = vxpose.xlu0.b32.cont [4/16] 0.0, 128
    %130 = vxpose.xlu0.b32.cont [5/16] 0.0, 128
    %131 = vxpose.xlu0.b32.cont [6/16] 0.0, 128
    %132 = vxpose.xlu0.b32.cont [7/16] 0.0, 128
    %133 = vxpose.xlu0.b32.cont [8/16] 0.0, 128
    %134 = vxpose.xlu0.b32.cont [9/16] 0.0, 128
    %135 = vxpose.xlu0.b32.cont [10/16] 0.0, 128
    %136 = vxpose.xlu0.b32.cont [11/16] 0.0, 128
    %137 = vxpose.xlu0.b32.cont [12/16] 0.0, 128
    %138 = vxpose.xlu0.b32.cont [13/16] 0.0, 128
    %139 = vxpose.xlu0.b32.cont [14/16] 0.0, 128
    %140 = vxpose.xlu0.b32.cont [15/16] 0.0, 128
    %141 = vxpose.xlu0.b32.end [16/16] 0.0, 128
    %v142 = vpop.trf.xlu0
    %v143 = vpop.trf.xlu0
    %v144 = vpop.trf.xlu0
    %v145 = vpop.trf.xlu0
    %v146 = vpop.trf.xlu0
    %v147 = vpop.trf.xlu0
    %v148 = vpop.trf.xlu0
    %v149 = vpop.trf.xlu0
    %v150 = vpop.trf.xlu0
    %v151 = vpop.trf.xlu0
    %v152 = vpop.trf.xlu0
    %v153 = vpop.trf.xlu0
    %v154 = vpop.trf.xlu0
    %v155 = vpop.trf.xlu0
    %v156 = vpop.trf.xlu0
    %v157 = vpop.trf.xlu0
    %v159 = vrot.slane %v142, 2
    %vm161 = vcmask 1045504
    %v162 = vsel %vm161, %v107, %v159
    %vm163 = vcmask 130048
    %v164 = vsel %vm163, %v162, 0.0
    %165 = vadd.xlane.f32.xlu0 %v164
    %v166 = vpop.xlane.xlu0 %165
    %vm167 = vcmask 125952
    %v168 = vsel %vm167, %v159, 0.0
    %169 = vadd.xlane.f32.xlu0 %v168
    %v170 = vpop.xlane.xlu0 %169
    %v171 = vrcp.pop 16.0
    %v172 = vmul.f32 %v166, %v171
    %v173 = vmul.f32 %v170, %v171
    %v174 = vsub.f32 %v162, %v172
    %v175 = vsub.f32 %v159, %v173
    %v176 = vmul.f32 %v174, %v174
    %v177 = vmul.f32 %v175, %v175
    %v178 = vsel %vm163, %v176, 0.0
    %179 = vadd.xlane.f32.xlu0 %v178
    %v180 = vpop.xlane.xlu0 %179
    %v181 = vsel %vm167, %v177, 0.0
    %182 = vadd.xlane.f32.xlu0 %v181
    %v183 = vpop.xlane.xlu0 %182
    %v184 = vmul.f32 %v180, %v171
    %v185 = vmul.f32 %v183, %v171
    %v186 = vadd.f32 %v184, 1e-05
    %v187 = vadd.f32 %v185, 1e-05
    %v188 = vrsqrt.pop %v186
    %v189 = vmul.f32 %v186, %v188
    %vm190 = vcmp.eq.f32.partialorder %v186, inf
    %v191 = vsel %vm190, %v186, %v189
    %vm192 = vcmp.eq.f32.partialorder %v186, 0.0
    %v193 = vand.u32 %v186, 2147483648
    %v194 = vsel %vm192, %v193, %v191
    %v195 = vrsqrt.pop %v187
    %v196 = vmul.f32 %v187, %v195
    %vm197 = vcmp.eq.f32.partialorder %v187, inf
    %v198 = vsel %vm197, %v187, %v196
    %vm199 = vcmp.eq.f32.partialorder %v187, 0.0
    %v200 = vand.u32 %v187, 2147483648
    %v201 = vsel %vm199, %v200, %v198
    %v202 = vrsqrt.pop %v186
    %v203 = vrsqrt.pop %v187
    %v204 = vmul.f32 %v174, %v202
    %v205 = vmul.f32 %v175, %v203
    %v207 = vlaneseq
    %v208 = vshrl.u32 %v207, 7
    %v209 = vsub.s32 0, %v208
    %v210 = vrot.slane %v88, %v209
    %v213 = vsel %vm163, %v204, 0
    %v216 = vsel %vm163, %v205, 0
    %218 = vmatprep.subr.mxu0 0.0
    %219 = vmatpush1.msra.mxu0 %v86
    %220 = vmatprep.subr.mxu0 0.0
    %221 = vmatpush1.msra.mxu0 %v87
    %222 = vmatprep.subr.mxu0 0.0
    %223 = vmatpush1.msra.mxu0 0.0
    %224 = vmatprep.subr.mxu0 0.0
    %225 = vmatpush1.msra.mxu0 0.0
    %226 = vmatprep.subr.mxu0 0.0
    %227 = vmatpush1.msra.mxu0 0.0
    %228 = vmatprep.subr.mxu0 0.0
    %229 = vmatpush1.msra.mxu0 0.0
    %230 = vmatprep.subr.mxu0 0.0
    %231 = vmatpush1.msra.mxu0 0.0
    %232 = vmatprep.subr.mxu0 0.0
    %233 = vmatpush1.msra.mxu0 0.0
    %234 = vmatprep.subr.mxu0 0.0
    %235 = vmatpush1.msra.mxu0 0.0
    %236 = vmatprep.subr.mxu0 0.0
    %237 = vmatpush1.msra.mxu0 0.0
    %238 = vmatprep.subr.mxu0 0.0
    %239 = vmatpush1.msra.mxu0 0.0
    %240 = vmatprep.subr.mxu0 0.0
    %241 = vmatpush1.msra.mxu0 0.0
    %242 = vmatprep.subr.mxu0 0.0
    %243 = vmatpush1.msra.mxu0 0.0
    %244 = vmatprep.subr.mxu0 0.0
    %245 = vmatpush1.msra.mxu0 0.0
    %246 = vmatprep.subr.mxu0 0.0
    %247 = vmatpush1.msra.mxu0 0.0
    %248 = vmatprep.subr.mxu0 0.0
    %249 = vmatpush1.msra.mxu0 0.0
    %250 = vmatprep.subr.mxu0 0.0
    %251 = vmatpush1.msra.mxu0 0.0
    %252 = vmatprep.subr.mxu0 0.0
    %253 = vmatpush1.msra.mxu0 0.0
    %254 = vmatprep.subr.mxu0 0.0
    %255 = vmatpush1.msra.mxu0 0.0
    %256 = vmatprep.subr.mxu0 0.0
    %257 = vmatpush1.msra.mxu0 0.0
    %258 = vmatprep.subr.mxu0 0.0
    %259 = vmatpush1.msra.mxu0 0.0
    %260 = vmatprep.subr.mxu0 0.0
    %261 = vmatpush1.msra.mxu0 0.0
    %262 = vmatprep.subr.mxu0 0.0
    %263 = vmatpush1.msra.mxu0 0.0
    %264 = vmatprep.subr.mxu0 0.0
    %265 = vmatpush1.msra.mxu0 0.0
    %266 = vmatprep.subr.mxu0 0.0
    %267 = vmatpush1.msra.mxu0 0.0
    %268 = vmatprep.subr.mxu0 0.0
    %269 = vmatpush1.msra.mxu0 0.0
    %270 = vmatprep.subr.mxu0 0.0
    %271 = vmatpush1.msra.mxu0 0.0
    %272 = vmatprep.subr.mxu0 0.0
    %273 = vmatpush1.msra.mxu0 0.0
    %274 = vmatprep.subr.mxu0 0.0
    %275 = vmatpush1.msra.mxu0 0.0
    %276 = vmatprep.subr.mxu0 0.0
    %277 = vmatpush1.msra.mxu0 0.0
    %278 = vmatprep.subr.mxu0 0.0
    %279 = vmatpush1.msra.mxu0 0.0
    %280 = vmatprep.subr.mxu0 0.0
    %281 = vmatpush1.msra.mxu0 0.0
    %282 = vmatprep.mubr.f32.mxu0 0.0
    %283 = vmatmul.mubr.f32.gmra.mrb[0].mxu0 %v213
    %v284 = vpop.f32.mrb[0].mxu0
    %v285 = vadd.f32 %v210, %v284
    %v286 = vpop.f32.mrb[0].mxu0
    %287 = vmatprep.mubr.f32.mxu0 0.0
    %288 = vmatmul.mubr.f32.gmra.mrb[0].mxu0 %v216
    %v289 = vpop.f32.mrb[0].mxu0
    %v290 = vadd.f32 %v210, %v289
    %v291 = vpop.f32.mrb[0].mxu0
    %292 = vdwg.mxu0
    %v294 = vlaneseq
    %v295 = vshrl.u32 %v294, 7
    %v296 = vsub.s32 0, %v295
    %v297 = vrot.slane %v71, %v296
    %vm299 = vcmask 261120
    %v301 = vsel %vm299, %v285, 0
    %v304 = vsel %vm299, %v290, 0
    %306 = vmatprep.subr.mxu0 0.0
    %307 = vmatpush1.msra.mxu0 %v63
    %308 = vmatprep.subr.mxu0 0.0
    %309 = vmatpush1.msra.mxu0 %v64
    %310 = vmatprep.subr.mxu0 0.0
    %311 = vmatpush1.msra.mxu0 %v65
    %312 = vmatprep.subr.mxu0 0.0
    %313 = vmatpush1.msra.mxu0 %v66
    %314 = vmatprep.subr.mxu0 0.0
    %315 = vmatpush1.msra.mxu0 0.0
    %316 = vmatprep.subr.mxu0 0.0
    %317 = vmatpush1.msra.mxu0 0.0
    %318 = vmatprep.subr.mxu0 0.0
    %319 = vmatpush1.msra.mxu0 0.0
    %320 = vmatprep.subr.mxu0 0.0
    %321 = vmatpush1.msra.mxu0 0.0
    %322 = vmatprep.subr.mxu0 0.0
    %323 = vmatpush1.msra.mxu0 0.0
    %324 = vmatprep.subr.mxu0 0.0
    %325 = vmatpush1.msra.mxu0 0.0
    %326 = vmatprep.subr.mxu0 0.0
    %327 = vmatpush1.msra.mxu0 0.0
    %328 = vmatprep.subr.mxu0 0.0
    %329 = vmatpush1.msra.mxu0 0.0
    %330 = vmatprep.subr.mxu0 0.0
    %331 = vmatpush1.msra.mxu0 0.0
    %332 = vmatprep.subr.mxu0 0.0
    %333 = vmatpush1.msra.mxu0 0.0
    %334 = vmatprep.subr.mxu0 0.0
    %335 = vmatpush1.msra.mxu0 0.0
    %336 = vmatprep.subr.mxu0 0.0
    %337 = vmatpush1.msra.mxu0 0.0
    %338 = vmatprep.subr.mxu0 0.0
    %339 = vmatpush1.msra.mxu0 0.0
    %340 = vmatprep.subr.mxu0 0.0
    %341 = vmatpush1.msra.mxu0 0.0
    %342 = vmatprep.subr.mxu0 0.0
    %343 = vmatpush1.msra.mxu0 0.0
    %344 = vmatprep.subr.mxu0 0.0
    %345 = vmatpush1.msra.mxu0 0.0
    %346 = vmatprep.subr.mxu0 0.0
    %347 = vmatpush1.msra.mxu0 0.0
    %348 = vmatprep.subr.mxu0 0.0
    %349 = vmatpush1.msra.mxu0 0.0
    %350 = vmatprep.subr.mxu0 0.0
    %351 = vmatpush1.msra.mxu0 0.0
    %352 = vmatprep.subr.mxu0 0.0
    %353 = vmatpush1.msra.mxu0 0.0
    %354 = vmatprep.subr.mxu0 0.0
    %355 = vmatpush1.msra.mxu0 0.0
    %356 = vmatprep.subr.mxu0 0.0
    %357 = vmatpush1.msra.mxu0 0.0
    %358 = vmatprep.subr.mxu0 0.0
    %359 = vmatpush1.msra.mxu0 0.0
    %360 = vmatprep.subr.mxu0 0.0
    %361 = vmatpush1.msra.mxu0 0.0
    %362 = vmatprep.subr.mxu0 0.0
    %363 = vmatpush1.msra.mxu0 0.0
    %364 = vmatprep.subr.mxu0 0.0
    %365 = vmatpush1.msra.mxu0 0.0
    %366 = vmatprep.subr.mxu0 0.0
    %367 = vmatpush1.msra.mxu0 0.0
    %368 = vmatprep.subr.mxu0 0.0
    %369 = vmatpush1.msra.mxu0 0.0
    %370 = vmatprep.mubr.f32.mxu0 0.0
    %371 = vmatmul.mubr.f32.gmra.mrb[0].mxu0 %v301
    %v372 = vpop.f32.mrb[0].mxu0
    %v373 = vadd.f32 %v297, %v372
    %v374 = vpop.f32.mrb[0].mxu0
    %375 = vmatprep.mubr.f32.mxu0 0.0
    %376 = vmatmul.mubr.f32.gmra.mrb[0].mxu0 %v304
    %v377 = vpop.f32.mrb[0].mxu0
    %v378 = vadd.f32 %v297, %v377
    %v379 = vpop.f32.mrb[0].mxu0
    %380 = vdwg.mxu0
    %v382 = vlaneseq
    %v383 = vshrl.u32 %v382, 7
    %v384 = vsub.s32 0, %v383
    %v385 = vrot.slane %v80, %v384
    %v387 = vxor.u32 %v373, 2147483648
    %v388 = vmul.f32 %v387, 1.442695
    %v389 = vpow.pop %v388
    %v390 = vadd.f32 %v389, 1.0
    %v391 = vrcp.pop %v390
    %v392 = vmul.f32 1.0, %v391
    %v393 = vtanh.pop %v373
    %395 = vrot.lane.b32.xlu0 %v393, 64
    %v396 = vpop.permute.xlu0 %395
    %v398 = vmul.f32 %v392, %v396
    %v399 = vtanh.pop %v398
    %401 = vrot.lane.b32.xlu0 %v399, 96
    %v402 = vpop.permute.xlu0 %401
    %v404 = vmul.f32 %v392, %v402
    %406 = vrot.lane.b32.xlu0 %v404, 32
    %v407 = vpop.permute.xlu0 %406
    %v408 = vsel %vm299, %v407, 0
    %410 = vmatprep.subr.mxu0 0.0
    %411 = vmatpush1.msra.mxu0 %v72
    %412 = vmatprep.subr.mxu0 0.0
    %413 = vmatpush1.msra.mxu0 %v73
    %414 = vmatprep.subr.mxu0 0.0
    %415 = vmatpush1.msra.mxu0 %v74
    %416 = vmatprep.subr.mxu0 0.0
    %417 = vmatpush1.msra.mxu0 %v75
    %418 = vmatprep.subr.mxu0 0.0
    %419 = vmatpush1.msra.mxu0 0.0
    %420 = vmatprep.subr.mxu0 0.0
    %421 = vmatpush1.msra.mxu0 0.0
    %422 = vmatprep.subr.mxu0 0.0
    %423 = vmatpush1.msra.mxu0 0.0
    %424 = vmatprep.subr.mxu0 0.0
    %425 = vmatpush1.msra.mxu0 0.0
    %426 = vmatprep.subr.mxu0 0.0
    %427 = vmatpush1.msra.mxu0 0.0
    %428 = vmatprep.subr.mxu0 0.0
    %429 = vmatpush1.msra.mxu0 0.0
    %430 = vmatprep.subr.mxu0 0.0
    %431 = vmatpush1.msra.mxu0 0.0
    %432 = vmatprep.subr.mxu0 0.0
    %433 = vmatpush1.msra.mxu0 0.0
    %434 = vmatprep.subr.mxu0 0.0
    %435 = vmatpush1.msra.mxu0 0.0
    %436 = vmatprep.subr.mxu0 0.0
    %437 = vmatpush1.msra.mxu0 0.0
    %438 = vmatprep.subr.mxu0 0.0
    %439 = vmatpush1.msra.mxu0 0.0
    %440 = vmatprep.subr.mxu0 0.0
    %441 = vmatpush1.msra.mxu0 0.0
    %442 = vmatprep.subr.mxu0 0.0
    %443 = vmatpush1.msra.mxu0 0.0
    %444 = vmatprep.subr.mxu0 0.0
    %445 = vmatpush1.msra.mxu0 0.0
    %446 = vmatprep.subr.mxu0 0.0
    %447 = vmatpush1.msra.mxu0 0.0
    %448 = vmatprep.subr.mxu0 0.0
    %449 = vmatpush1.msra.mxu0 0.0
    %450 = vmatprep.subr.mxu0 0.0
    %451 = vmatpush1.msra.mxu0 0.0
    %452 = vmatprep.subr.mxu0 0.0
    %453 = vmatpush1.msra.mxu0 0.0
    %454 = vmatprep.subr.mxu0 0.0
    %455 = vmatpush1.msra.mxu0 0.0
    %456 = vmatprep.subr.mxu0 0.0
    %457 = vmatpush1.msra.mxu0 0.0
    %458 = vmatprep.subr.mxu0 0.0
    %459 = vmatpush1.msra.mxu0 0.0
    %460 = vmatprep.subr.mxu0 0.0
    %461 = vmatpush1.msra.mxu0 0.0
    %462 = vmatprep.subr.mxu0 0.0
    %463 = vmatpush1.msra.mxu0 0.0
    %464 = vmatprep.subr.mxu0 0.0
    %465 = vmatpush1.msra.mxu0 0.0
    %466 = vmatprep.subr.mxu0 0.0
    %467 = vmatpush1.msra.mxu0 0.0
    %468 = vmatprep.subr.mxu0 0.0
    %469 = vmatpush1.msra.mxu0 0.0
    %470 = vmatprep.subr.mxu0 0.0
    %471 = vmatpush1.msra.mxu0 0.0
    %472 = vmatprep.subr.mxu0 0.0
    %473 = vmatpush1.msra.mxu0 0.0
    %474 = vmatprep.mubr.f32.mxu0 0.0
    %475 = vmatmul.mubr.f32.gmra.mrb[0].mxu0 %v408
    %v476 = vpop.f32.mrb[0].mxu0
    %v477 = vadd.f32 %v385, %v476
    %v478 = vpop.f32.mrb[0].mxu0
    %479 = vdwg.mxu0
    %v480 = vxor.u32 %v477, 2147483648
    %v481 = vmul.f32 %v480, 1.442695
    %v482 = vpow.pop %v481
    %v483 = vadd.f32 %v482, 1.0
    %v484 = vrcp.pop %v483
    %v485 = vmul.f32 1.0, %v484
    %v486 = vtanh.pop %v477
    %488 = vrot.lane.b32.xlu0 %v486, 64
    %v489 = vpop.permute.xlu0 %488
    %v491 = vmul.f32 %v485, %v489
    %v492 = vtanh.pop %v491
    %494 = vrot.lane.b32.xlu0 %v492, 96
    %v495 = vpop.permute.xlu0 %494
    %v497 = vmul.f32 %v485, %v495
    %498 = vmatprep.subr.mxu0 0.0
    %499 = vmatpush1.msra.mxu0 %v67
    %500 = vmatprep.subr.mxu0 0.0
    %501 = vmatpush1.msra.mxu0 %v68
    %502 = vmatprep.subr.mxu0 0.0
    %503 = vmatpush1.msra.mxu0 %v69
    %504 = vmatprep.subr.mxu0 0.0
    %505 = vmatpush1.msra.mxu0 %v70
    %506 = vmatprep.subr.mxu0 0.0
    %507 = vmatpush1.msra.mxu0 0.0
    %508 = vmatprep.subr.mxu0 0.0
    %509 = vmatpush1.msra.mxu0 0.0
    %510 = vmatprep.subr.mxu0 0.0
    %511 = vmatpush1.msra.mxu0 0.0
    %512 = vmatprep.subr.mxu0 0.0
    %513 = vmatpush1.msra.mxu0 0.0
    %514 = vmatprep.subr.mxu0 0.0
    %515 = vmatpush1.msra.mxu0 0.0
    %516 = vmatprep.subr.mxu0 0.0
    %517 = vmatpush1.msra.mxu0 0.0
    %518 = vmatprep.subr.mxu0 0.0
    %519 = vmatpush1.msra.mxu0 0.0
    %520 = vmatprep.subr.mxu0 0.0
    %521 = vmatpush1.msra.mxu0 0.0
    %522 = vmatprep.subr.mxu0 0.0
    %523 = vmatpush1.msra.mxu0 0.0
    %524 = vmatprep.subr.mxu0 0.0
    %525 = vmatpush1.msra.mxu0 0.0
    %526 = vmatprep.subr.mxu0 0.0
    %527 = vmatpush1.msra.mxu0 0.0
    %528 = vmatprep.subr.mxu0 0.0
    %529 = vmatpush1.msra.mxu0 0.0
    %530 = vmatprep.subr.mxu0 0.0
    %531 = vmatpush1.msra.mxu0 0.0
    %532 = vmatprep.subr.mxu0 0.0
    %533 = vmatpush1.msra.mxu0 0.0
    %534 = vmatprep.subr.mxu0 0.0
    %535 = vmatpush1.msra.mxu0 0.0
    %536 = vmatprep.subr.mxu0 0.0
    %537 = vmatpush1.msra.mxu0 0.0
    %538 = vmatprep.subr.mxu0 0.0
    %539 = vmatpush1.msra.mxu0 0.0
    %540 = vmatprep.subr.mxu0 0.0
    %541 = vmatpush1.msra.mxu0 0.0
    %542 = vmatprep.subr.mxu0 0.0
    %543 = vmatpush1.msra.mxu0 0.0
    %544 = vmatprep.subr.mxu0 0.0
    %545 = vmatpush1.msra.mxu0 0.0
    %546 = vmatprep.subr.mxu0 0.0
    %547 = vmatpush1.msra.mxu0 0.0
    %548 = vmatprep.subr.mxu0 0.0
    %549 = vmatpush1.msra.mxu0 0.0
    %550 = vmatprep.subr.mxu0 0.0
    %551 = vmatpush1.msra.mxu0 0.0
    %552 = vmatprep.subr.mxu0 0.0
    %553 = vmatpush1.msra.mxu0 0.0
    %554 = vmatprep.subr.mxu0 0.0
    %555 = vmatpush1.msra.mxu0 0.0
    %556 = vmatprep.subr.mxu0 0.0
    %557 = vmatpush1.msra.mxu0 0.0
    %558 = vmatprep.subr.mxu0 0.0
    %559 = vmatpush1.msra.mxu0 0.0
    %560 = vmatprep.subr.mxu0 0.0
    %561 = vmatpush1.msra.mxu0 0.0
    %562 = vmatprep.mubr.f32.mxu0 0.0
    %563 = vmatmul.mubr.f32.gmra.mrb[0].mxu0 %v408
    %v564 = vpop.f32.mrb[0].mxu0
    %v565 = vadd.f32 0.0, %v564
    %v566 = vpop.f32.mrb[0].mxu0
    %567 = vdwg.mxu0
    %v569 = vrot.slane %v565, 2
    %v571 = vadd.f32 %v373, %v569
    %v572 = vadd.f32 %v378, %v569
    %v573 = vxor.u32 %v571, 2147483648
    %v574 = vxor.u32 %v572, 2147483648
    %v575 = vmul.f32 %v573, 1.442695
    %v576 = vpow.pop %v575
    %v577 = vmul.f32 %v574, 1.442695
    %v578 = vpow.pop %v577
    %v579 = vadd.f32 %v576, 1.0
    %v580 = vadd.f32 %v578, 1.0
    %v581 = vrcp.pop %v579
    %v582 = vmul.f32 1.0, %v581
    %v583 = vrcp.pop %v580
    %v584 = vmul.f32 1.0, %v583
    %v585 = vtanh.pop %v571
    %v586 = vtanh.pop %v572
    %v588 = vrot.slane %v398, 2
    %589 = vrot.lane.b32.xlu0 %v588, 32
    %v590 = vpop.permute.xlu0 %589
    %v592 = vmul.f32 %v582, %v590
    %v593 = vmul.f32 %v584, %v590
    %596 = vrot.lane.b32.xlu0 %v585, 64
    %v597 = vpop.permute.xlu0 %596
    %598 = vrot.lane.b32.xlu0 %v586, 64
    %v599 = vpop.permute.xlu0 %598
    %v602 = vmul.f32 %v582, %v597
    %v603 = vmul.f32 %v584, %v599
    %606 = vrot.lane.b32.xlu0 %v602, 32
    %v607 = vpop.permute.xlu0 %606
    %608 = vrot.lane.b32.xlu0 %v603, 32
    %v609 = vpop.permute.xlu0 %608
    %v612 = vadd.f32 %v592, %v607
    %v613 = vadd.f32 %v593, %v609
    %v614 = vtanh.pop %v612
    %v615 = vtanh.pop %v613
    %618 = vrot.lane.b32.xlu0 %v614, 64
    %v619 = vpop.permute.xlu0 %618
    %620 = vrot.lane.b32.xlu0 %v615, 64
    %v621 = vpop.permute.xlu0 %620
    %v624 = vmul.f32 %v582, %v619
    %v625 = vmul.f32 %v584, %v621
    %628 = vrot.lane.b32.xlu0 %v624, 32
    %v629 = vpop.permute.xlu0 %628
    %630 = vrot.lane.b32.xlu0 %v625, 32
    %v631 = vpop.permute.xlu0 %630
    %v635 = vrot.slane %v497, 2
    %636 = vrot.lane.b32.xlu0 %v635, 64
    %v637 = vpop.permute.xlu0 %636
    %v639 = vsel %vm299, %v629, %v637
    %v640 = vsel %vm299, %v631, %v637
    %vm643 = vcmask 1041408
    %v644 = vrot.slane %v639, 6
    %v645 = vrot.slane %v640, 6
    %v646 = vsel %vm643, %v644, %v645
    %vm647 = vcmask 523264
    %v648 = vsel %vm647, %v646, 0
    %650 = vmatprep.subr.mxu0 0.0
    %651 = vmatpush1.msra.mxu0 %v72
    %652 = vmatprep.subr.mxu0 0.0
    %653 = vmatpush1.msra.mxu0 %v73
    %654 = vmatprep.subr.mxu0 0.0
    %655 = vmatpush1.msra.mxu0 %v74
    %656 = vmatprep.subr.mxu0 0.0
    %657 = vmatpush1.msra.mxu0 %v75
    %658 = vmatprep.subr.mxu0 0.0
    %659 = vmatpush1.msra.mxu0 %v76
    %660 = vmatprep.subr.mxu0 0.0
    %661 = vmatpush1.msra.mxu0 %v77
    %662 = vmatprep.subr.mxu0 0.0
    %663 = vmatpush1.msra.mxu0 %v78
    %664 = vmatprep.subr.mxu0 0.0
    %665 = vmatpush1.msra.mxu0 %v79
    %666 = vmatprep.subr.mxu0 0.0
    %667 = vmatpush1.msra.mxu0 0.0
    %668 = vmatprep.subr.mxu0 0.0
    %669 = vmatpush1.msra.mxu0 0.0
    %670 = vmatprep.subr.mxu0 0.0
    %671 = vmatpush1.msra.mxu0 0.0
    %672 = vmatprep.subr.mxu0 0.0
    %673 = vmatpush1.msra.mxu0 0.0
    %674 = vmatprep.subr.mxu0 0.0
    %675 = vmatpush1.msra.mxu0 0.0
    %676 = vmatprep.subr.mxu0 0.0
    %677 = vmatpush1.msra.mxu0 0.0
    %678 = vmatprep.subr.mxu0 0.0
    %679 = vmatpush1.msra.mxu0 0.0
    %680 = vmatprep.subr.mxu0 0.0
    %681 = vmatpush1.msra.mxu0 0.0
    %682 = vmatprep.subr.mxu0 0.0
    %683 = vmatpush1.msra.mxu0 0.0
    %684 = vmatprep.subr.mxu0 0.0
    %685 = vmatpush1.msra.mxu0 0.0
    %686 = vmatprep.subr.mxu0 0.0
    %687 = vmatpush1.msra.mxu0 0.0
    %688 = vmatprep.subr.mxu0 0.0
    %689 = vmatpush1.msra.mxu0 0.0
    %690 = vmatprep.subr.mxu0 0.0
    %691 = vmatpush1.msra.mxu0 0.0
    %692 = vmatprep.subr.mxu0 0.0
    %693 = vmatpush1.msra.mxu0 0.0
    %694 = vmatprep.subr.mxu0 0.0
    %695 = vmatpush1.msra.mxu0 0.0
    %696 = vmatprep.subr.mxu0 0.0
    %697 = vmatpush1.msra.mxu0 0.0
    %698 = vmatprep.subr.mxu0 0.0
    %699 = vmatpush1.msra.mxu0 0.0
    %700 = vmatprep.subr.mxu0 0.0
    %701 = vmatpush1.msra.mxu0 0.0
    %702 = vmatprep.subr.mxu0 0.0
    %703 = vmatpush1.msra.mxu0 0.0
    %704 = vmatprep.subr.mxu0 0.0
    %705 = vmatpush1.msra.mxu0 0.0
    %706 = vmatprep.subr.mxu0 0.0
    %707 = vmatpush1.msra.mxu0 0.0
    %708 = vmatprep.subr.mxu0 0.0
    %709 = vmatpush1.msra.mxu0 0.0
    %710 = vmatprep.subr.mxu0 0.0
    %711 = vmatpush1.msra.mxu0 0.0
    %712 = vmatprep.subr.mxu0 0.0
    %713 = vmatpush1.msra.mxu0 0.0
    %714 = vmatprep.mubr.f32.mxu0 0.0
    %715 = vmatmul.mubr.f32.gmra.mrb[0].mxu0 %v648
    %v716 = vpop.f32.mrb[0].mxu0
    %v717 = vadd.f32 %v385, %v716
    %v718 = vpop.f32.mrb[0].mxu0
    %719 = vdwg.mxu0
    %v720 = vxor.u32 %v717, 2147483648
    %v721 = vmul.f32 %v720, 1.442695
    %v722 = vpow.pop %v721
    %v723 = vadd.f32 %v722, 1.0
    %v724 = vrcp.pop %v723
    %v725 = vmul.f32 1.0, %v724
    %v726 = vtanh.pop %v717
    %728 = vrot.lane.b32.xlu0 %v491, 32
    %v729 = vpop.permute.xlu0 %728
    %v731 = vmul.f32 %v725, %v729
    %733 = vrot.lane.b32.xlu0 %v726, 64
    %v734 = vpop.permute.xlu0 %733
    %v736 = vmul.f32 %v725, %v734
    %738 = vrot.lane.b32.xlu0 %v736, 32
    %v739 = vpop.permute.xlu0 %738
    %v741 = vadd.f32 %v731, %v739
    %v742 = vtanh.pop %v741
    %744 = vrot.lane.b32.xlu0 %v742, 64
    %v745 = vpop.permute.xlu0 %744
    %v747 = vmul.f32 %v725, %v745
    %v749 = vrot.slane %v747, 2
    %v751 = vsel %vm161, %v497, %v749
    %v753 = vlaneseq
    %v754 = vshrl.u32 %v753, 7
    %v755 = vsub.s32 0, %v754
    %v756 = vrot.slane %v85, %v755
    %759 = vrot.lane.b32.xlu0 %v751, 32
    %v760 = vpop.permute.xlu0 %759
    %761 = vrot.lane.b32.xlu0 %v749, 32
    %v762 = vpop.permute.xlu0 %761
    %v763 = vsel %vm299, %v760, 0
    %v765 = vsel %vm299, %v762, 0
    %767 = vmatprep.subr.mxu0 0.0
    %768 = vmatpush1.msra.mxu0 %v81
    %769 = vmatprep.subr.mxu0 0.0
    %770 = vmatpush1.msra.mxu0 %v82
    %771 = vmatprep.subr.mxu0 0.0
    %772 = vmatpush1.msra.mxu0 %v83
    %773 = vmatprep.subr.mxu0 0.0
    %774 = vmatpush1.msra.mxu0 %v84
    %775 = vmatprep.subr.mxu0 0.0
    %776 = vmatpush1.msra.mxu0 0.0
    %777 = vmatprep.subr.mxu0 0.0
    %778 = vmatpush1.msra.mxu0 0.0
    %779 = vmatprep.subr.mxu0 0.0
    %780 = vmatpush1.msra.mxu0 0.0
    %781 = vmatprep.subr.mxu0 0.0
    %782 = vmatpush1.msra.mxu0 0.0
    %783 = vmatprep.subr.mxu0 0.0
    %784 = vmatpush1.msra.mxu0 0.0
    %785 = vmatprep.subr.mxu0 0.0
    %786 = vmatpush1.msra.mxu0 0.0
    %787 = vmatprep.subr.mxu0 0.0
    %788 = vmatpush1.msra.mxu0 0.0
    %789 = vmatprep.subr.mxu0 0.0
    %790 = vmatpush1.msra.mxu0 0.0
    %791 = vmatprep.subr.mxu0 0.0
    %792 = vmatpush1.msra.mxu0 0.0
    %793 = vmatprep.subr.mxu0 0.0
    %794 = vmatpush1.msra.mxu0 0.0
    %795 = vmatprep.subr.mxu0 0.0
    %796 = vmatpush1.msra.mxu0 0.0
    %797 = vmatprep.subr.mxu0 0.0
    %798 = vmatpush1.msra.mxu0 0.0
    %799 = vmatprep.subr.mxu0 0.0
    %800 = vmatpush1.msra.mxu0 0.0
    %801 = vmatprep.subr.mxu0 0.0
    %802 = vmatpush1.msra.mxu0 0.0
    %803 = vmatprep.subr.mxu0 0.0
    %804 = vmatpush1.msra.mxu0 0.0
    %805 = vmatprep.subr.mxu0 0.0
    %806 = vmatpush1.msra.mxu0 0.0
    %807 = vmatprep.subr.mxu0 0.0
    %808 = vmatpush1.msra.mxu0 0.0
    %809 = vmatprep.subr.mxu0 0.0
    %810 = vmatpush1.msra.mxu0 0.0
    %811 = vmatprep.subr.mxu0 0.0
    %812 = vmatpush1.msra.mxu0 0.0
    %813 = vmatprep.subr.mxu0 0.0
    %814 = vmatpush1.msra.mxu0 0.0
    %815 = vmatprep.subr.mxu0 0.0
    %816 = vmatpush1.msra.mxu0 0.0
    %817 = vmatprep.subr.mxu0 0.0
    %818 = vmatpush1.msra.mxu0 0.0
    %819 = vmatprep.subr.mxu0 0.0
    %820 = vmatpush1.msra.mxu0 0.0
    %821 = vmatprep.subr.mxu0 0.0
    %822 = vmatpush1.msra.mxu0 0.0
    %823 = vmatprep.subr.mxu0 0.0
    %824 = vmatpush1.msra.mxu0 0.0
    %825 = vmatprep.subr.mxu0 0.0
    %826 = vmatpush1.msra.mxu0 0.0
    %827 = vmatprep.subr.mxu0 0.0
    %828 = vmatpush1.msra.mxu0 0.0
    %829 = vmatprep.subr.mxu0 0.0
    %830 = vmatpush1.msra.mxu0 0.0
    %831 = vmatprep.mubr.f32.mxu0 0.0
    %832 = vmatmul.mubr.f32.gmra.mrb[0].mxu0 %v763
    %v833 = vpop.f32.mrb[0].mxu0
    %v834 = vadd.f32 %v756, %v833
    %v835 = vpop.f32.mrb[0].mxu0
    %836 = vmatprep.mubr.f32.mxu0 0.0
    %837 = vmatmul.mubr.f32.gmra.mrb[0].mxu0 %v765
    %v838 = vpop.f32.mrb[0].mxu0
    %v839 = vadd.f32 %v756, %v838
    %v840 = vpop.f32.mrb[0].mxu0
    %841 = vdwg.mxu0
    %v842 = vmul.f32 %v834, %v194
    %v843 = vmul.f32 %v839, %v201
    %v844 = vadd.f32 %v842, %v172
    %v845 = vadd.f32 %v843, %v173
    %846 = vxpose.xlu0.b32.start [1/16] %v844, 128
    %847 = vxpose.xlu0.b32.cont [2/16] 0.0, 128
    %848 = vxpose.xlu0.b32.cont [3/16] 0.0, 128
    %849 = vxpose.xlu0.b32.cont [4/16] 0.0, 128
    %850 = vxpose.xlu0.b32.cont [5/16] 0.0, 128
    %851 = vxpose.xlu0.b32.cont [6/16] 0.0, 128
    %852 = vxpose.xlu0.b32.cont [7/16] 0.0, 128
    %853 = vxpose.xlu0.b32.cont [8/16] 0.0, 128
    %854 = vxpose.xlu0.b32.cont [9/16] 0.0, 128
    %855 = vxpose.xlu0.b32.cont [10/16] 0.0, 128
    %856 = vxpose.xlu0.b32.cont [11/16] 0.0, 128
    %857 = vxpose.xlu0.b32.cont [12/16] 0.0, 128
    %858 = vxpose.xlu0.b32.cont [13/16] 0.0, 128
    %859 = vxpose.xlu0.b32.cont [14/16] 0.0, 128
    %860 = vxpose.xlu0.b32.cont [15/16] 0.0, 128
    %861 = vxpose.xlu0.b32.end [16/16] 0.0, 128
    %v862 = vpop.trf.xlu0
    %v863 = vpop.trf.xlu0
    %v864 = vpop.trf.xlu0
    %v865 = vpop.trf.xlu0
    %v866 = vpop.trf.xlu0
    %v867 = vpop.trf.xlu0
    %v868 = vpop.trf.xlu0
    %v869 = vpop.trf.xlu0
    %v870 = vpop.trf.xlu0
    %v871 = vpop.trf.xlu0
    %v872 = vpop.trf.xlu0
    %v873 = vpop.trf.xlu0
    %v874 = vpop.trf.xlu0
    %v875 = vpop.trf.xlu0
    %v876 = vpop.trf.xlu0
    %v877 = vpop.trf.xlu0
    %vm878 = vcmask 48128
    %879 = vst.msk [vmem:[%s10] sm:$0xff] %vm878, %v862
    %v882 = vrot.slane %v844, 6
    %v883 = vrot.slane %v845, 6
    %v884 = vsel %vm643, %v882, %v883
    %886 = vxpose.xlu0.b32.start [1/16] %v884, 128
    %887 = vxpose.xlu0.b32.cont [2/16] 0.0, 128
    %888 = vxpose.xlu0.b32.cont [3/16] 0.0, 128
    %889 = vxpose.xlu0.b32.cont [4/16] 0.0, 128
    %890 = vxpose.xlu0.b32.cont [5/16] 0.0, 128
    %891 = vxpose.xlu0.b32.cont [6/16] 0.0, 128
    %892 = vxpose.xlu0.b32.cont [7/16] 0.0, 128
    %893 = vxpose.xlu0.b32.cont [8/16] 0.0, 128
    %894 = vxpose.xlu0.b32.cont [9/16] 0.0, 128
    %895 = vxpose.xlu0.b32.cont [10/16] 0.0, 128
    %896 = vxpose.xlu0.b32.cont [11/16] 0.0, 128
    %897 = vxpose.xlu0.b32.cont [12/16] 0.0, 128
    %898 = vxpose.xlu0.b32.cont [13/16] 0.0, 128
    %899 = vxpose.xlu0.b32.cont [14/16] 0.0, 128
    %900 = vxpose.xlu0.b32.cont [15/16] 0.0, 128
    %901 = vxpose.xlu0.b32.end [16/16] 0.0, 128
    %v902 = vpop.trf.xlu0
    %v903 = vpop.trf.xlu0
    %v904 = vpop.trf.xlu0
    %v905 = vpop.trf.xlu0
    %v906 = vpop.trf.xlu0
    %v907 = vpop.trf.xlu0
    %v908 = vpop.trf.xlu0
    %v909 = vpop.trf.xlu0
    %v910 = vpop.trf.xlu0
    %v911 = vpop.trf.xlu0
    %v912 = vpop.trf.xlu0
    %v913 = vpop.trf.xlu0
    %v914 = vpop.trf.xlu0
    %v915 = vpop.trf.xlu0
    %v916 = vpop.trf.xlu0
    %v917 = vpop.trf.xlu0
    %s918 = scalar_lea.vmem %s10, 8
    %919 = vst.msk [vmem:[%s918] sm:$0xff] %vm878, %v902
    // Predicated region
    $region50: #{tpu_custom_call.1} parent=1 // pred_check
      _
    $region51: #{tpu_custom_call.1} parent=1 // pred_check_branch
      %921 = sbr.rel (0) target = $region53
    $region52: #{tpu_custom_call.1} parent=1 // pred_region
      _
    $region53: #{tpu_custom_call.1} parent=1 // pred_fallthru
      _
    // Predicated region
    $region54: #{tpu_custom_call.1} parent=1 // pred_check
      _
    $region55: #{tpu_custom_call.1} parent=1 // pred_check_branch
      %923 = sbr.rel (0) target = $region57
    $region56: #{tpu_custom_call.1} parent=1 // pred_region
      _
    $region57: #{tpu_custom_call.1} parent=1 // pred_fallthru
      _
    %924 = vsyncpa [#allocation3], 1
    %925 = vsyncpa [#allocation5], 1

</llo_original>
